<compile_context>
chip_gen: v7x
topology: tpu7x:2x2x1
jax: 0.10.0
libtpu: 0.0.40
codegen_flags: <defaults>
</compile_context>

<pallas_src>
import jax
import jax.numpy as jnp
from jax.experimental import pallas as pl
from jax.experimental.pallas import tpu as pltpu


def _round_up(x: int, m: int) -> int:
    return ((x + m - 1) // m) * m


def _linear_kernel(x_ref, w_ref, b_ref, o_ref):
    # MXU matmul with f32 accumulation + broadcasted bias add on the VPU.
    acc = jnp.dot(x_ref[...], w_ref[...], preferred_element_type=jnp.float32)
    o_ref[...] = (acc + b_ref[...]).astype(o_ref.dtype)


def _vmem_capacity_bytes() -> int:
    """Per-core VMEM capacity; conservative v7x default if query fails."""
    try:
        return int(pltpu.get_tpu_info().vmem_capacity_bytes)
    except Exception:
        return 64 * 2**20


def _pick_tm(n: int) -> int:
    """Batch tile size.

    - n <= 16: single full-extent tile (legal even if n % 8 != 0).
    - n > 16: at least 2 grid steps so v7x's 2 TensorCores both get work
      ("parallel" axis); multiple of 128 and capped at 512 once large, which
      sits at the v5e/v6e HBM-roofline sweet spot and matches MXU tile edges.
    """
    if n <= 16:
        return n
    half = pl.cdiv(n, 2)
    if half <= 128:
        return _round_up(half, 8)
    return min(512, _round_up(half, 128))


def _build_call(N, D, O, TM, vmem_limit, single_buffer_weights):
    resident_kwargs = (
        dict(pipeline_mode=pl.Buffered(1)) if single_buffer_weights else {}
    )
    return pl.pallas_call(
        _linear_kernel,
        out_shape=jax.ShapeDtypeStruct((N, O), jnp.float32),
        grid_spec=pl.GridSpec(
            grid=(pl.cdiv(N, TM),),
            in_specs=[
                pl.BlockSpec((TM, D), lambda i: (i, 0)),
                # Constant index_map -> weights/bias stay resident in VMEM
                # across the batch grid (no per-tile re-DMA), single-buffered.
                pl.BlockSpec((D, O), lambda i: (0, 0), **resident_kwargs),
                pl.BlockSpec((1, O), lambda i: (0, 0), **resident_kwargs),
            ],
            out_specs=pl.BlockSpec((TM, O), lambda i: (i, 0)),
        ),
        compiler_params=pltpu.CompilerParams(
            dimension_semantics=("parallel",),
            vmem_limit_bytes=vmem_limit,
        ),
        cost_estimate=pl.CostEstimate(
            flops=2 * N * D * O,
            bytes_accessed=4 * (N * D + D * O + N * O),
            transcendentals=0,
        ),
    )


def linear_regression_forward(x, w, b):
    """y = x @ w + b via a batch-tiled Pallas kernel (no wrapper padding).

    x: (N, D) float32
    w: (D, O) float32
    b: (O,)   float32
    returns (N, O) float32
    """
    N, D = x.shape
    D2, O = w.shape
    assert D == D2
    assert b.shape == (O,)

    x = x.astype(jnp.float32)
    w = w.astype(jnp.float32)
    b2 = b.astype(jnp.float32).reshape(1, O)

    TM = _pick_tm(N)

    # VMEM budget: double-buffered x/out tiles + single-buffered resident w/b
    # + slack; cap leaves headroom for compiler-internal scratch per chip gen
    # (~40 MiB usable on v7x, ~104 MiB on v5e/v6e).
    cap = max(_vmem_capacity_bytes() - 24 * 2**20, 16 * 2**20)

    def _budget(tm: int) -> int:
        return 4 * (2 * (tm * D + tm * O) + (D * O + O)) + 4 * 2**20

    while TM > 8 and _budget(TM) > cap:
        TM = max(8, _round_up(TM // 2, 8))
    # TODO(synk): if the (D, O) weight itself cannot stay resident in VMEM
    # (huge D*O), add an output-column grid axis plus a trailing reduction
    # ("arbitrary") axis with a VMEM f32 accumulator and pl.when init/finalize
    # instead of a resident weight slab.

    vmem_limit = int(min(max(_budget(TM), 16 * 2**20), cap))

    try:
        return _build_call(N, D, O, TM, vmem_limit, True)(x, w, b2)
    except Exception:
        # Fallback for JAX versions without Buffered(1) pipeline_mode support.
        return _build_call(N, D, O, TM, vmem_limit, False)(x, w, b2)


if __name__ == "__main__":
    # Small shapes consistent with the module: batch=8, input_dim=32, output_dim=4.
    key = jax.random.PRNGKey(0)
    kx, kw, kb, kx2 = jax.random.split(key, 4)

    N, D, O = 8, 32, 4
    x = jax.random.normal(kx, (N, D), dtype=jnp.float32)
    # Deterministic parameter init (stands in for LinearLayer's init).
    w = jax.random.normal(kw, (D, O), dtype=jnp.float32) * 0.1
    b = jax.random.normal(kb, (O,), dtype=jnp.float32) * 0.1

    y = linear_regression_forward(x, w, b)
    jax.block_until_ready(y)
    y_ref = x @ w + b
    assert y.shape == (N, O)
    assert jnp.allclose(y, y_ref, atol=1e-5, rtol=1e-5)

    # Second case exercising the multi-step grid + masked boundary tile
    # (N=100 -> TM=56, grid=(2,), last tile only 44 valid rows).
    N2 = 100
    x2 = jax.random.normal(kx2, (N2, D), dtype=jnp.float32)
    y2 = linear_regression_forward(x2, w, b)
    jax.block_until_ready(y2)
    y2_ref = x2 @ w + b
    assert y2.shape == (N2, O)
    assert jnp.allclose(y2, y2_ref, atol=1e-5, rtol=1e-5)

    print("KERNEL_OK")
</pallas_src>

<mosaic_0001>
module attributes {stable_mosaic.version = 11 : i64} {
  func.func @_linear_kernel(%arg0: i32, %arg1: memref<8x32xf32, #tpu.memory_space<vmem>>, %arg2: memref<32x4xf32, #tpu.memory_space<vmem>>, %arg3: memref<1x4xf32, #tpu.memory_space<vmem>>, %arg4: memref<8x4xf32, #tpu.memory_space<vmem>>) attributes {dimension_semantics = [#tpu.dimension_semantics<parallel>], iteration_bounds = array<i64: 1>, scalar_prefetch = 0 : i64, scratch_operands = 0 : i64, tpu.core_type = #tpu.core_type<tc>, window_params = [{transform_indices = @transform_0, window_bounds = array<i64: 8, 32>}, {pipeline_mode = #tpu.pipeline_mode<synchronous>, transform_indices = @transform_1, window_bounds = array<i64: 32, 4>}, {pipeline_mode = #tpu.pipeline_mode<synchronous>, transform_indices = @transform_2, window_bounds = array<i64: 1, 4>}, {transform_indices = @transform_3, window_bounds = array<i64: 8, 4>}]} {
    %c0 = arith.constant 0 : index
    %c0_0 = arith.constant 0 : index
    %0 = vector.load %arg1[%c0, %c0_0] : memref<8x32xf32, #tpu.memory_space<vmem>>, vector<8x32xf32>
    %c0_1 = arith.constant 0 : index
    %c0_2 = arith.constant 0 : index
    %1 = vector.load %arg2[%c0_1, %c0_2] : memref<32x4xf32, #tpu.memory_space<vmem>>, vector<32x4xf32>
    %cst = arith.constant dense<0.000000e+00> : vector<8x4xf32>
    %2 = tpu.matmul %0, %1, %cst {dimension_numbers = #tpu.dot_dimension_numbers<[1], [0], [0], [1], [0, 0, 1, 1], [], []>} : vector<8x32xf32>, vector<32x4xf32>, vector<8x4xf32> -> vector<8x4xf32>
    %c0_3 = arith.constant 0 : index
    %c0_4 = arith.constant 0 : index
    %3 = vector.load %arg3[%c0_3, %c0_4] : memref<1x4xf32, #tpu.memory_space<vmem>>, vector<1x4xf32>
    %4 = vector.broadcast %3 : vector<1x4xf32> to vector<8x4xf32>
    %5 = arith.addf %2, %4 : vector<8x4xf32>
    %c0_5 = arith.constant 0 : index
    %c0_6 = arith.constant 0 : index
    %6 = vector.load %arg4[%c0_5, %c0_6] : memref<8x4xf32, #tpu.memory_space<vmem>>, vector<8x4xf32>
    tpu.vector_store %arg4[%c0_5, %c0_6], %5 {strides = array<i32>} : memref<8x4xf32, #tpu.memory_space<vmem>>, vector<8x4xf32>,
    return
  }
  func.func @transform_0(%arg0: i32) -> (i32, i32) {
    %c0_i32 = arith.constant 0 : i32
    %c0_i32_0 = arith.constant 0 : i32
    return %arg0, %c0_i32 : i32, i32
  }
  func.func @transform_1(%arg0: i32) -> (i32, i32) {
    %c0_i32 = arith.constant 0 : i32
    %c0_i32_0 = arith.constant 0 : i32
    %c0_i32_1 = arith.constant 0 : i32
    return %c0_i32, %c0_i32_0 : i32, i32
  }
  func.func @transform_2(%arg0: i32) -> (i32, i32) {
    %c0_i32 = arith.constant 0 : i32
    %c0_i32_0 = arith.constant 0 : i32
    %c0_i32_1 = arith.constant 0 : i32
    return %c0_i32, %c0_i32_0 : i32, i32
  }
  func.func @transform_3(%arg0: i32) -> (i32, i32) {
    %c0_i32 = arith.constant 0 : i32
    %c0_i32_0 = arith.constant 0 : i32
    return %arg0, %c0_i32 : i32, i32
  }
}

module attributes {stable_mosaic.version = 11 : i64} {
  func.func @_linear_kernel(%arg0: i32, %arg1: memref<8x32xf32, #tpu.memory_space<vmem>>, %arg2: memref<32x4xf32, #tpu.memory_space<vmem>>, %arg3: memref<1x4xf32, #tpu.memory_space<vmem>>, %arg4: memref<8x4xf32, #tpu.memory_space<vmem>>) attributes {dimension_semantics = [#tpu.dimension_semantics<parallel>], iteration_bounds = array<i64: 1>, scalar_prefetch = 0 : i64, scratch_operands = 0 : i64, tpu.core_type = #tpu.core_type<tc>, window_params = [{transform_indices = @transform_0, window_bounds = array<i64: 8, 32>}, {pipeline_mode = #tpu.pipeline_mode<synchronous>, transform_indices = @transform_1, window_bounds = array<i64: 32, 4>}, {pipeline_mode = #tpu.pipeline_mode<synchronous>, transform_indices = @transform_2, window_bounds = array<i64: 1, 4>}, {transform_indices = @transform_3, window_bounds = array<i64: 8, 4>}]} {
    %c0 = arith.constant 0 : index
    %c0_0 = arith.constant 0 : index
    %0 = vector.load %arg1[%c0, %c0_0] : memref<8x32xf32, #tpu.memory_space<vmem>>, vector<8x32xf32>
    %c0_1 = arith.constant 0 : index
    %c0_2 = arith.constant 0 : index
    %1 = vector.load %arg2[%c0_1, %c0_2] : memref<32x4xf32, #tpu.memory_space<vmem>>, vector<32x4xf32>
    %cst = arith.constant dense<0.000000e+00> : vector<8x4xf32>
    %2 = tpu.matmul %0, %1, %cst {dimension_numbers = #tpu.dot_dimension_numbers<[1], [0], [0], [1], [0, 0, 1, 1], [], []>} : vector<8x32xf32>, vector<32x4xf32>, vector<8x4xf32> -> vector<8x4xf32>
    %c0_3 = arith.constant 0 : index
    %c0_4 = arith.constant 0 : index
    %3 = vector.load %arg3[%c0_3, %c0_4] : memref<1x4xf32, #tpu.memory_space<vmem>>, vector<1x4xf32>
    %4 = vector.broadcast %3 : vector<1x4xf32> to vector<8x4xf32>
    %5 = arith.addf %2, %4 : vector<8x4xf32>
    %c0_5 = arith.constant 0 : index
    %c0_6 = arith.constant 0 : index
    %6 = vector.load %arg4[%c0_5, %c0_6] : memref<8x4xf32, #tpu.memory_space<vmem>>, vector<8x4xf32>
    tpu.vector_store %arg4[%c0_5, %c0_6], %5 {strides = array<i32>} : memref<8x4xf32, #tpu.memory_space<vmem>>, vector<8x4xf32>,
    return
  }
  func.func @transform_0(%arg0: i32) -> (i32, i32) {
    %c0_i32 = arith.constant 0 : i32
    %c0_i32_0 = arith.constant 0 : i32
    return %arg0, %c0_i32 : i32, i32
  }
  func.func @transform_1(%arg0: i32) -> (i32, i32) {
    %c0_i32 = arith.constant 0 : i32
    %c0_i32_0 = arith.constant 0 : i32
    %c0_i32_1 = arith.constant 0 : i32
    return %c0_i32, %c0_i32_0 : i32, i32
  }
  func.func @transform_2(%arg0: i32) -> (i32, i32) {
    %c0_i32 = arith.constant 0 : i32
    %c0_i32_0 = arith.constant 0 : i32
    %c0_i32_1 = arith.constant 0 : i32
    return %c0_i32, %c0_i32_0 : i32, i32
  }
  func.func @transform_3(%arg0: i32) -> (i32, i32) {
    %c0_i32 = arith.constant 0 : i32
    %c0_i32_0 = arith.constant 0 : i32
    return %arg0, %c0_i32 : i32, i32
  }
}

</mosaic_0001>

<llo_original>
// kernel: tpu_custom_call.1
$region0: #{tpu_custom_call.1}
  #allocation0 [shape = 'u32[]', space=smem, size = 0x4, offset = 0x4, fixed_abs, tag = 'smem constant byte address 0x4 - core index']
  #allocation1 [shape = 'u32[144,128]{1,0:T(1,128)}', space=vmem, size = 0x12000, scoped, tag = 'internal scratch']
  %s0 = inlined_call_operand.vmem [shape: f32[8,32], index: 0, kind: input, shape index: {}]
  %s1 = inlined_call_operand.vmem [shape: f32[32,4], index: 1, kind: input, shape index: {}]
  %s2 = inlined_call_operand.vmem [shape: f32[1,4], index: 2, kind: input, shape index: {}]
  %s3 = inlined_call_operand.vmem [shape: f32[8,4], index: 3, kind: output, shape index: {}]
  %s4 = sld [smem:[#allocation0]]
  $region22: #{tpu_custom_call.1} parent=0
    _
  %s6 = ssub.s32 1, %s4
  %s7 = scalar_select 0, %s6, %s4
  // Predicated region
  $region2: #{tpu_custom_call.1} parent=0 // pred_check
    _
  $region3: #{tpu_custom_call.1} parent=0 // pred_check_branch
    %9 = sbr.rel (0) target = $region5
  $region4: #{tpu_custom_call.1} parent=0 // pred_region
    _
  $region5: #{tpu_custom_call.1} parent=0 // pred_fallthru
    _
  // Predicated region
  $region6: #{tpu_custom_call.1} parent=0 // pred_check
    _
  $region7: #{tpu_custom_call.1} parent=0 // pred_check_branch
    %11 = sbr.rel (0) target = $region9
  $region8: #{tpu_custom_call.1} parent=0 // pred_region
    _
  $region9: #{tpu_custom_call.1} parent=0 // pred_fallthru
    _
  // Predicated region
  $region10: #{tpu_custom_call.1} parent=0 // pred_check
    _
  $region11: #{tpu_custom_call.1} parent=0 // pred_check_branch
    %13 = sbr.rel (0) target = $region13
  $region12: #{tpu_custom_call.1} parent=0 // pred_region
    _
  $region13: #{tpu_custom_call.1} parent=0 // pred_fallthru
    _
  %v14 = vld [vmem:[%s0] sm:$0xff]
  %v15 = vld [vmem:[%s1] sm:$0xff]
  %v16 = vld [vmem:[%s1 + $0x8] sm:$0xff]
  %v17 = vld [vmem:[%s1 + $0x10] sm:$0xff]
  %v18 = vld [vmem:[%s1 + $0x18] sm:$0xff]
  %v19 = vld [vmem:[%s2] sm:$0x1]
  %v21 = vlaneseq
  %v22 = vshrl.u32 %v21, 7
  %v23 = vsub.s32 0, %v22
  %v24 = vrot.slane %v19, %v23
  %vm26 = vcmask 261120
  %v28 = vsel %vm26, %v14, 0
  %30 = vmatprep.subr.mxu0 0.0
  %31 = vmatpush1.msra.mxu0 %v15
  %32 = vmatprep.subr.mxu0 0.0
  %33 = vmatpush1.msra.mxu0 %v16
  %34 = vmatprep.subr.mxu0 0.0
  %35 = vmatpush1.msra.mxu0 %v17
  %36 = vmatprep.subr.mxu0 0.0
  %37 = vmatpush1.msra.mxu0 %v18
  %38 = vmatprep.subr.mxu0 0.0
  %39 = vmatpush1.msra.mxu0 0.0
  %40 = vmatprep.subr.mxu0 0.0
  %41 = vmatpush1.msra.mxu0 0.0
  %42 = vmatprep.subr.mxu0 0.0
  %43 = vmatpush1.msra.mxu0 0.0
  %44 = vmatprep.subr.mxu0 0.0
  %45 = vmatpush1.msra.mxu0 0.0
  %46 = vmatprep.subr.mxu0 0.0
  %47 = vmatpush1.msra.mxu0 0.0
  %48 = vmatprep.subr.mxu0 0.0
  %49 = vmatpush1.msra.mxu0 0.0
  %50 = vmatprep.subr.mxu0 0.0
  %51 = vmatpush1.msra.mxu0 0.0
  %52 = vmatprep.subr.mxu0 0.0
  %53 = vmatpush1.msra.mxu0 0.0
  %54 = vmatprep.subr.mxu0 0.0
  %55 = vmatpush1.msra.mxu0 0.0
  %56 = vmatprep.subr.mxu0 0.0
  %57 = vmatpush1.msra.mxu0 0.0
  %58 = vmatprep.subr.mxu0 0.0
  %59 = vmatpush1.msra.mxu0 0.0
  %60 = vmatprep.subr.mxu0 0.0
  %61 = vmatpush1.msra.mxu0 0.0
  %62 = vmatprep.subr.mxu0 0.0
  %63 = vmatpush1.msra.mxu0 0.0
  %64 = vmatprep.subr.mxu0 0.0
  %65 = vmatpush1.msra.mxu0 0.0
  %66 = vmatprep.subr.mxu0 0.0
  %67 = vmatpush1.msra.mxu0 0.0
  %68 = vmatprep.subr.mxu0 0.0
  %69 = vmatpush1.msra.mxu0 0.0
  %70 = vmatprep.subr.mxu0 0.0
  %71 = vmatpush1.msra.mxu0 0.0
  %72 = vmatprep.subr.mxu0 0.0
  %73 = vmatpush1.msra.mxu0 0.0
  %74 = vmatprep.subr.mxu0 0.0
  %75 = vmatpush1.msra.mxu0 0.0
  %76 = vmatprep.subr.mxu0 0.0
  %77 = vmatpush1.msra.mxu0 0.0
  %78 = vmatprep.subr.mxu0 0.0
  %79 = vmatpush1.msra.mxu0 0.0
  %80 = vmatprep.subr.mxu0 0.0
  %81 = vmatpush1.msra.mxu0 0.0
  %82 = vmatprep.subr.mxu0 0.0
  %83 = vmatpush1.msra.mxu0 0.0
  %84 = vmatprep.subr.mxu0 0.0
  %85 = vmatpush1.msra.mxu0 0.0
  %86 = vmatprep.subr.mxu0 0.0
  %87 = vmatpush1.msra.mxu0 0.0
  %88 = vmatprep.subr.mxu0 0.0
  %89 = vmatpush1.msra.mxu0 0.0
  %90 = vmatprep.subr.mxu0 0.0
  %91 = vmatpush1.msra.mxu0 0.0
  %92 = vmatprep.subr.mxu0 0.0
  %93 = vmatpush1.msra.mxu0 0.0
  %94 = vmatprep.mubr.f32.mxu0 0.0
  %95 = vmatmul.mubr.f32.gmra.mrb[0].mxu0 %v28
  %v96 = vpop.f32.mrb[0].mxu0
  %v97 = vadd.f32 %v24, %v96
  %v98 = vpop.f32.mrb[0].mxu0
  %99 = vdwg.mxu0
  %vm100 = vcmask 31744
  %101 = vst.msk [vmem:[%s3] sm:$0xff] %vm100, %v97
  // Predicated region
  $region14: #{tpu_custom_call.1} parent=0 // pred_check
    _
  $region15: #{tpu_custom_call.1} parent=0 // pred_check_branch
    %103 = sbr.rel (0) target = $region17
  $region16: #{tpu_custom_call.1} parent=0 // pred_region
    _
  $region17: #{tpu_custom_call.1} parent=0 // pred_fallthru
    _
  // Predicated region
  $region18: #{tpu_custom_call.1} parent=0 // pred_check
    _
  $region19: #{tpu_custom_call.1} parent=0 // pred_check_branch
    %105 = sbr.rel (0) target = $region21
  $region20: #{tpu_custom_call.1} parent=0 // pred_region
    _
  $region21: #{tpu_custom_call.1} parent=0 // pred_fallthru
    _

// kernel: tpu_custom_call.1
$region0: #{tpu_custom_call.1}
  #allocation0 [shape = 'u32[]', space=smem, size = 0x4, offset = 0x4, fixed_abs, tag = 'smem constant byte address 0x4 - core index']
  #allocation1 [shape = 'u32[144,128]{1,0:T(1,128)}', space=vmem, size = 0x12000, scoped, tag = 'internal scratch']
  %s0 = inlined_call_operand.vmem [shape: f32[8,32], index: 0, kind: input, shape index: {}]
  %s1 = inlined_call_operand.vmem [shape: f32[32,4], index: 1, kind: input, shape index: {}]
  %s2 = inlined_call_operand.vmem [shape: f32[1,4], index: 2, kind: input, shape index: {}]
  %s3 = inlined_call_operand.vmem [shape: f32[8,4], index: 3, kind: output, shape index: {}]
  %s4 = sld [smem:[#allocation0]]
  $region22: #{tpu_custom_call.1} parent=0
    _
  %s6 = ssub.s32 1, %s4
  %s7 = scalar_select 0, %s6, %s4
  // Predicated region
  $region2: #{tpu_custom_call.1} parent=0 // pred_check
    _
  $region3: #{tpu_custom_call.1} parent=0 // pred_check_branch
    %9 = sbr.rel (0) target = $region5
  $region4: #{tpu_custom_call.1} parent=0 // pred_region
    _
  $region5: #{tpu_custom_call.1} parent=0 // pred_fallthru
    _
  // Predicated region
  $region6: #{tpu_custom_call.1} parent=0 // pred_check
    _
  $region7: #{tpu_custom_call.1} parent=0 // pred_check_branch
    %11 = sbr.rel (0) target = $region9
  $region8: #{tpu_custom_call.1} parent=0 // pred_region
    _
  $region9: #{tpu_custom_call.1} parent=0 // pred_fallthru
    _
  // Predicated region
  $region10: #{tpu_custom_call.1} parent=0 // pred_check
    _
  $region11: #{tpu_custom_call.1} parent=0 // pred_check_branch
    %13 = sbr.rel (0) target = $region13
  $region12: #{tpu_custom_call.1} parent=0 // pred_region
    _
  $region13: #{tpu_custom_call.1} parent=0 // pred_fallthru
    _
  %v14 = vld [vmem:[%s0] sm:$0xff]
  %v15 = vld [vmem:[%s1] sm:$0xff]
  %v16 = vld [vmem:[%s1 + $0x8] sm:$0xff]
  %v17 = vld [vmem:[%s1 + $0x10] sm:$0xff]
  %v18 = vld [vmem:[%s1 + $0x18] sm:$0xff]
  %v19 = vld [vmem:[%s2] sm:$0x1]
  %v21 = vlaneseq
  %v22 = vshrl.u32 %v21, 7
  %v23 = vsub.s32 0, %v22
  %v24 = vrot.slane %v19, %v23
  %vm26 = vcmask 261120
  %v28 = vsel %vm26, %v14, 0
  %30 = vmatprep.subr.mxu0 0.0
  %31 = vmatpush1.msra.mxu0 %v15
  %32 = vmatprep.subr.mxu0 0.0
  %33 = vmatpush1.msra.mxu0 %v16
  %34 = vmatprep.subr.mxu0 0.0
  %35 = vmatpush1.msra.mxu0 %v17
  %36 = vmatprep.subr.mxu0 0.0
  %37 = vmatpush1.msra.mxu0 %v18
  %38 = vmatprep.subr.mxu0 0.0
  %39 = vmatpush1.msra.mxu0 0.0
  %40 = vmatprep.subr.mxu0 0.0
  %41 = vmatpush1.msra.mxu0 0.0
  %42 = vmatprep.subr.mxu0 0.0
  %43 = vmatpush1.msra.mxu0 0.0
  %44 = vmatprep.subr.mxu0 0.0
  %45 = vmatpush1.msra.mxu0 0.0
  %46 = vmatprep.subr.mxu0 0.0
  %47 = vmatpush1.msra.mxu0 0.0
  %48 = vmatprep.subr.mxu0 0.0
  %49 = vmatpush1.msra.mxu0 0.0
  %50 = vmatprep.subr.mxu0 0.0
  %51 = vmatpush1.msra.mxu0 0.0
  %52 = vmatprep.subr.mxu0 0.0
  %53 = vmatpush1.msra.mxu0 0.0
  %54 = vmatprep.subr.mxu0 0.0
  %55 = vmatpush1.msra.mxu0 0.0
  %56 = vmatprep.subr.mxu0 0.0
  %57 = vmatpush1.msra.mxu0 0.0
  %58 = vmatprep.subr.mxu0 0.0
  %59 = vmatpush1.msra.mxu0 0.0
  %60 = vmatprep.subr.mxu0 0.0
  %61 = vmatpush1.msra.mxu0 0.0
  %62 = vmatprep.subr.mxu0 0.0
  %63 = vmatpush1.msra.mxu0 0.0
  %64 = vmatprep.subr.mxu0 0.0
  %65 = vmatpush1.msra.mxu0 0.0
  %66 = vmatprep.subr.mxu0 0.0
  %67 = vmatpush1.msra.mxu0 0.0
  %68 = vmatprep.subr.mxu0 0.0
  %69 = vmatpush1.msra.mxu0 0.0
  %70 = vmatprep.subr.mxu0 0.0
  %71 = vmatpush1.msra.mxu0 0.0
  %72 = vmatprep.subr.mxu0 0.0
  %73 = vmatpush1.msra.mxu0 0.0
  %74 = vmatprep.subr.mxu0 0.0
  %75 = vmatpush1.msra.mxu0 0.0
  %76 = vmatprep.subr.mxu0 0.0
  %77 = vmatpush1.msra.mxu0 0.0
  %78 = vmatprep.subr.mxu0 0.0
  %79 = vmatpush1.msra.mxu0 0.0
  %80 = vmatprep.subr.mxu0 0.0
  %81 = vmatpush1.msra.mxu0 0.0
  %82 = vmatprep.subr.mxu0 0.0
  %83 = vmatpush1.msra.mxu0 0.0
  %84 = vmatprep.subr.mxu0 0.0
  %85 = vmatpush1.msra.mxu0 0.0
  %86 = vmatprep.subr.mxu0 0.0
  %87 = vmatpush1.msra.mxu0 0.0
  %88 = vmatprep.subr.mxu0 0.0
  %89 = vmatpush1.msra.mxu0 0.0
  %90 = vmatprep.subr.mxu0 0.0
  %91 = vmatpush1.msra.mxu0 0.0
  %92 = vmatprep.subr.mxu0 0.0
  %93 = vmatpush1.msra.mxu0 0.0
  %94 = vmatprep.mubr.f32.mxu0 0.0
  %95 = vmatmul.mubr.f32.gmra.mrb[0].mxu0 %v28
  %v96 = vpop.f32.mrb[0].mxu0
  %v97 = vadd.f32 %v24, %v96
  %v98 = vpop.f32.mrb[0].mxu0
  %99 = vdwg.mxu0
  %vm100 = vcmask 31744
  %101 = vst.msk [vmem:[%s3] sm:$0xff] %vm100, %v97
  // Predicated region
  $region14: #{tpu_custom_call.1} parent=0 // pred_check
    _
  $region15: #{tpu_custom_call.1} parent=0 // pred_check_branch
    %103 = sbr.rel (0) target = $region17
  $region16: #{tpu_custom_call.1} parent=0 // pred_region
    _
  $region17: #{tpu_custom_call.1} parent=0 // pred_fallthru
    _
  // Predicated region
  $region18: #{tpu_custom_call.1} parent=0 // pred_check
    _
  $region19: #{tpu_custom_call.1} parent=0 // pred_check_branch
    %105 = sbr.rel (0) target = $region21
  $region20: #{tpu_custom_call.1} parent=0 // pred_region
    _
  $region21: #{tpu_custom_call.1} parent=0 // pred_fallthru
    _

</llo_original>
